<compile_context>
chip_gen: v6e
topology: v6e:2x2x1
jax: 0.10.0
libtpu: 0.0.40
codegen_flags: <defaults>
</compile_context>

<pallas_src>
import numpy as np
import jax
import jax.numpy as jnp
from jax import lax
from jax.experimental import pallas as pl
from jax.experimental.pallas import tpu as pltpu


def make_kernel_np(k):
    """NumPy equivalent of the PyTorch make_kernel()."""
    k = np.asarray(k, dtype=np.float32)
    if k.ndim == 1:
        k = k[None, :] * k[:, None]
    k = k / k.sum()
    return k


def _round_up(x, m):
    return -(-x // m) * m


def _tpu_vmem_config():
    """(scoped vmem_limit_bytes, chip has 2 TensorCores) for the local TPU."""
    kind = ""
    try:
        kind = jax.devices()[0].device_kind.lower()
    except Exception:
        pass
    if "v7" in kind or "7x" in kind:
        return 48 * 1024 * 1024, True         # 64 MiB/TC physical -> stay under
    if "v6" in kind:
        return 96 * 1024 * 1024, False        # 128 MiB physical
    if "v5" in kind:
        return 64 * 1024 * 1024, False        # 128 MiB physical (16 MiB scoped default)
    return 64 * 1024 * 1024, False


def _fir_factor_matrices(kflip, factor, pad0, H, W, H_out, W_out):
    """Fold pad + FIR + decimation into per-axis matrices.

    Returns (ahT, aw) with ahT: (R, H, H_out), aw: (R, W, W_out) such that
        out_plane = sum_r  ahT[r].T @ x_plane @ aw[r]
    reproduces upfirdn2d(x, k, up=1, down=factor, pad=(pad0, pad1)).
    """
    kflip = np.asarray(kflip, dtype=np.float64)
    KH, KW = kflip.shape
    u, s, vt = np.linalg.svd(kflip, full_matrices=False)
    tol = s[0] * max(KH, KW) * 1e-12 if s[0] > 0 else 0.0
    R = max(1, int(np.sum(s > tol)))          # rank-1 for the usual 1-D FIRs
    ahT = np.zeros((R, H, H_out), np.float64)
    aw = np.zeros((R, W, W_out), np.float64)
    for r in range(R):
        hv = u[:, r] * np.sqrt(s[r])
        wv = vt[r, :] * np.sqrt(s[r])
        for i in range(H_out):
            for kh in range(KH):
                h = i * factor + kh - pad0
                if 0 <= h < H:
                    ahT[r, h, i] += hv[kh]
        for j in range(W_out):
            for kw in range(KW):
                w = j * factor + kw - pad0
                if 0 <= w < W:
                    aw[r, w, j] += wv[kw]
    return ahT.astype(np.float32), aw.astype(np.float32)


def downsample(x, kernel, factor=2, tile_b=None):
    """Pallas implementation of Downsample.forward.

    x:      (N, C, H, W) float array (f32 or bf16)
    kernel: 1-D or 2-D FIR kernel values (e.g. [1, 3, 3, 1]); static.
    """
    k2d = make_kernel_np(kernel)
    KH, KW = k2d.shape
    kflip = k2d[::-1, ::-1]                   # upfirdn2d convolves with flipped FIR

    p = KH - factor
    pad0, pad1 = (p + 1) // 2, p // 2

    N, C, H, W = x.shape
    B = N * C
    dtype = x.dtype
    # bf16 inputs stay bf16 in HBM and feed the MXU natively; everything else
    # computes in f32.  Accumulation is always f32.
    compute_dtype = jnp.bfloat16 if dtype == jnp.bfloat16 else jnp.float32

    H_out = (H + pad0 + pad1 - KH) // factor + 1
    W_out = (W + pad0 + pad1 - KW) // factor + 1

    ahT_np, aw_np = _fir_factor_matrices(kflip, factor, pad0, H, W, H_out, W_out)
    R = aw_np.shape[0]
    aw_j = jnp.asarray(aw_np, dtype=compute_dtype)    # (R, W, W_out)
    ahT_j = jnp.asarray(ahT_np, dtype=jnp.float32)    # (R, H, H_out), f32 for accuracy

    x3 = x.reshape(B, H, W)                   # free view; stays in input dtype

    # ---- tile_b from the *physical* (sublane, lane)-padded VMEM footprint ----
    vmem_limit, two_tc = _tpu_vmem_config()
    item = jnp.dtype(dtype).itemsize
    subl = 8 * max(1, 4 // item)              # 8 sublanes for f32, 16 for bf16
    in_plane = _round_up(H, subl) * _round_up(W, 128) * item
    out_plane = _round_up(H_out, subl) * _round_up(W_out, 128) * item
    # f32 temporaries the kernel materializes per plane (t1, t1^T, t2, acc):
    tmp_plane = 4 * (_round_up(H, 8) * _round_up(W_out, 128)
                     + _round_up(W_out, 8) * _round_up(H, 128)
                     + _round_up(W_out, 8) * _round_up(H_out, 128)
                     + _round_up(H_out, 8) * _round_up(W_out, 128))
    per_plane = 2 * in_plane + 2 * out_plane + tmp_plane   # in/out double-buffered
    budget = int(0.7 * vmem_limit)            # ~30% headroom for compiler scratch
    cap = min(B, max(1, budget // max(per_plane, 1)))
    if two_tc and B >= 2:
        cap = max(1, min(cap, B // 2))        # >= 2 grid steps -> both TCs busy
    if tile_b is None:
        tile_b = 1
        for d in range(cap, 0, -1):           # largest divisor of B (no pad copy)
            if B % d == 0:
                tile_b = d
                break
    assert B % tile_b == 0, "tile_b must divide N*C"
    n_tiles = B // tile_b

    def kernel_fn(x_ref, aw_ref, ah_ref, o_ref):
        # x_ref : (tile_b, H, W)        input dtype
        # aw_ref: (R, W, W_out)         compute dtype
        # ah_ref: (R, H, H_out)         f32
        # o_ref : (tile_b, H_out, W_out)
        x2 = x_ref[...].reshape(tile_b * H, W)
        acc = None
        for r in range(R):
            # W-axis pad + FIR + decimation on the MXU (contiguous loads only).
            t1 = jnp.dot(x2, aw_ref[r], preferred_element_type=jnp.float32)
            t1 = jnp.swapaxes(t1.reshape(tile_b, H, W_out), 1, 2)   # (tb, Wo, H)
            # H-axis pad + FIR + decimation.
            t2 = jnp.dot(t1.reshape(tile_b * W_out, H), ah_ref[r],
                         preferred_element_type=jnp.float32)        # (tb*Wo, Ho)
            term = jnp.swapaxes(t2.reshape(tile_b, W_out, H_out), 1, 2)
            acc = term if acc is None else acc + term
        o_ref[...] = acc.astype(o_ref.dtype)

    flops = 2 * B * R * (H * W * W_out + W_out * H * H_out)
    bytes_accessed = (item * B * (H * W + H_out * W_out)
                      + 4 * R * (W * W_out + H * H_out))

    out3 = pl.pallas_call(
        kernel_fn,
        out_shape=jax.ShapeDtypeStruct((B, H_out, W_out), dtype),
        grid=(n_tiles,),
        in_specs=[
            pl.BlockSpec((tile_b, H, W), lambda i: (i, 0, 0)),
            pl.BlockSpec((R, W, W_out), lambda i: (0, 0, 0)),
            pl.BlockSpec((R, H, H_out), lambda i: (0, 0, 0)),
        ],
        out_specs=pl.BlockSpec((tile_b, H_out, W_out), lambda i: (i, 0, 0)),
        compiler_params=pltpu.CompilerParams(
            dimension_semantics=("parallel",),
            vmem_limit_bytes=vmem_limit),
        cost_estimate=pl.CostEstimate(
            flops=flops, transcendentals=0, bytes_accessed=bytes_accessed),
    )(x3, aw_j, ahT_j)

    return out3.reshape(N, C, H_out, W_out)


def downsample_ref(x, kernel, factor=2):
    """Pure-XLA reference: faithful upfirdn2d (pad -> conv(flip(k)) -> decimate)."""
    k2d = jnp.asarray(make_kernel_np(kernel))
    KH, KW = k2d.shape
    p = KH - factor
    pad0, pad1 = (p + 1) // 2, p // 2
    N, C, H, W = x.shape
    w = jnp.flip(k2d).reshape(1, 1, KH, KW).astype(jnp.float32)
    xr = x.astype(jnp.float32).reshape(N * C, 1, H, W)
    out = lax.conv_general_dilated(
        xr, w, window_strides=(factor, factor),
        padding=((pad0, pad1), (pad0, pad1)),
        dimension_numbers=("NCHW", "OIHW", "NCHW"),
        precision=lax.Precision.HIGHEST)
    return out.reshape(N, C, out.shape[2], out.shape[3]).astype(x.dtype)


if __name__ == "__main__":
    key = jax.random.PRNGKey(0)
    k1, k2, k3 = jax.random.split(key, 3)

    # Test 1: canonical Downsample([1, 3, 3, 1], factor=2); explicit tile_b=4
    # so the grid has 2 steps and exercises the pipelined path.
    x = jax.random.normal(k1, (2, 4, 16, 16), dtype=jnp.float32)
    out = jax.block_until_ready(downsample(x, [1, 3, 3, 1], factor=2, tile_b=4))
    ref = jax.block_until_ready(downsample_ref(x, [1, 3, 3, 1], factor=2))
    assert out.shape == ref.shape
    np.testing.assert_allclose(np.asarray(out), np.asarray(ref),
                               rtol=5e-5, atol=5e-5)

    # Test 2: non-separable 2-D FIR (rank 2 -> exercises the multi-term path)
    # with B = 3 planes and auto tile_b selection.
    x2 = jax.random.normal(k2, (1, 3, 16, 16), dtype=jnp.float32)
    fir2 = [[1.0, 2.0, 1.0], [2.0, 5.0, 2.0], [1.0, 2.0, 1.0]]
    out2 = jax.block_until_ready(downsample(x2, fir2, factor=2))
    ref2 = jax.block_until_ready(downsample_ref(x2, fir2, factor=2))
    np.testing.assert_allclose(np.asarray(out2), np.asarray(ref2),
                               rtol=5e-5, atol=5e-5)

    # Test 3: bf16 input stays bf16 in HBM (kernel reads bf16, accumulates f32).
    x3 = jax.random.normal(k3, (2, 4, 16, 16), dtype=jnp.bfloat16)
    out3 = jax.block_until_ready(downsample(x3, [1, 3, 3, 1], factor=2))
    ref3 = jax.block_until_ready(downsample_ref(x3, [1, 3, 3, 1], factor=2))
    np.testing.assert_allclose(np.asarray(out3, dtype=np.float32),
                               np.asarray(ref3, dtype=np.float32),
                               rtol=2e-2, atol=2e-2)

    print("KERNEL_OK")
</pallas_src>

<mosaic_0001>
module attributes {stable_mosaic.version = 11 : i64} {
  func.func @kernel_fn(%arg0: i32, %arg1: memref<4x16x16xf32, #tpu.memory_space<vmem>>, %arg2: memref<1x16x8xf32, #tpu.memory_space<vmem>>, %arg3: memref<1x16x8xf32, #tpu.memory_space<vmem>>, %arg4: memref<4x8x8xf32, #tpu.memory_space<vmem>>) attributes {dimension_semantics = [#tpu.dimension_semantics<parallel>], iteration_bounds = array<i64: 2>, scalar_prefetch = 0 : i64, scratch_operands = 0 : i64, tpu.core_type = #tpu.core_type<tc>, window_params = [{transform_indices = @transform_0, window_bounds = array<i64: 4, 16, 16>}, {pipeline_mode = #tpu.pipeline_mode<synchronous>, transform_indices = @transform_1, window_bounds = array<i64: 1, 16, 8>}, {pipeline_mode = #tpu.pipeline_mode<synchronous>, transform_indices = @transform_2, window_bounds = array<i64: 1, 16, 8>}, {transform_indices = @transform_3, window_bounds = array<i64: 4, 8, 8>}]} {
    %c0 = arith.constant 0 : index
    %c0_0 = arith.constant 0 : index
    %c0_1 = arith.constant 0 : index
    %0 = vector.load %arg1[%c0, %c0_0, %c0_1] : memref<4x16x16xf32, #tpu.memory_space<vmem>>, vector<4x16x16xf32>
    %1 = vector.shape_cast %0 : vector<4x16x16xf32> to vector<64x16xf32>
    %c0_2 = arith.constant 0 : index
    %c0_3 = arith.constant 0 : index
    %c0_4 = arith.constant 0 : index
    %2 = vector.load %arg2[%c0_2, %c0_3, %c0_4] : memref<1x16x8xf32, #tpu.memory_space<vmem>>, vector<1x16x8xf32>
    %3 = vector.shape_cast %2 : vector<1x16x8xf32> to vector<16x8xf32>
    %cst = arith.constant dense<0.000000e+00> : vector<64x8xf32>
    %4 = tpu.matmul %1, %3, %cst {dimension_numbers = #tpu.dot_dimension_numbers<[1], [0], [0], [1], [0, 0, 1, 1], [], []>} : vector<64x16xf32>, vector<16x8xf32>, vector<64x8xf32> -> vector<64x8xf32>
    %5 = vector.shape_cast %4 : vector<64x8xf32> to vector<4x16x8xf32>
    %6 = tpu.transpose %5, [0, 2, 1] : vector<4x16x8xf32> -> vector<4x8x16xf32>
    %7 = vector.shape_cast %6 : vector<4x8x16xf32> to vector<32x16xf32>
    %c0_5 = arith.constant 0 : index
    %c0_6 = arith.constant 0 : index
    %c0_7 = arith.constant 0 : index
    %8 = vector.load %arg3[%c0_5, %c0_6, %c0_7] : memref<1x16x8xf32, #tpu.memory_space<vmem>>, vector<1x16x8xf32>
    %9 = vector.shape_cast %8 : vector<1x16x8xf32> to vector<16x8xf32>
    %cst_8 = arith.constant dense<0.000000e+00> : vector<32x8xf32>
    %10 = tpu.matmul %7, %9, %cst_8 {dimension_numbers = #tpu.dot_dimension_numbers<[1], [0], [0], [1], [0, 0, 1, 1], [], []>} : vector<32x16xf32>, vector<16x8xf32>, vector<32x8xf32> -> vector<32x8xf32>
    %11 = vector.shape_cast %10 : vector<32x8xf32> to vector<4x8x8xf32>
    %12 = tpu.transpose %11, [0, 2, 1] : vector<4x8x8xf32> -> vector<4x8x8xf32>
    %c0_9 = arith.constant 0 : index
    %c0_10 = arith.constant 0 : index
    %c0_11 = arith.constant 0 : index
    %13 = vector.load %arg4[%c0_9, %c0_10, %c0_11] : memref<4x8x8xf32, #tpu.memory_space<vmem>>, vector<4x8x8xf32>
    tpu.vector_store %arg4[%c0_9, %c0_10, %c0_11], %12 {strides = array<i32>} : memref<4x8x8xf32, #tpu.memory_space<vmem>>, vector<4x8x8xf32>,
    return
  }
  func.func @transform_0(%arg0: i32) -> (i32, i32, i32) {
    %c0_i32 = arith.constant 0 : i32
    %c0_i32_0 = arith.constant 0 : i32
    %c0_i32_1 = arith.constant 0 : i32
    return %arg0, %c0_i32, %c0_i32_0 : i32, i32, i32
  }
  func.func @transform_1(%arg0: i32) -> (i32, i32, i32) {
    %c0_i32 = arith.constant 0 : i32
    %c0_i32_0 = arith.constant 0 : i32
    %c0_i32_1 = arith.constant 0 : i32
    %c0_i32_2 = arith.constant 0 : i32
    return %c0_i32, %c0_i32_0, %c0_i32_1 : i32, i32, i32
  }
  func.func @transform_2(%arg0: i32) -> (i32, i32, i32) {
    %c0_i32 = arith.constant 0 : i32
    %c0_i32_0 = arith.constant 0 : i32
    %c0_i32_1 = arith.constant 0 : i32
    %c0_i32_2 = arith.constant 0 : i32
    return %c0_i32, %c0_i32_0, %c0_i32_1 : i32, i32, i32
  }
  func.func @transform_3(%arg0: i32) -> (i32, i32, i32) {
    %c0_i32 = arith.constant 0 : i32
    %c0_i32_0 = arith.constant 0 : i32
    %c0_i32_1 = arith.constant 0 : i32
    return %arg0, %c0_i32, %c0_i32_0 : i32, i32, i32
  }
}

</mosaic_0001>

<llo_original>
// kernel: tpu_custom_call.1
$region0: #{tpu_custom_call.1}
  #allocation0 [shape = 'u32[]', space=smem, size = 0x4, offset = 0x4, fixed_abs, tag = 'smem constant byte address 0x4 - core index']
  #allocation1 [shape = 'u32[144,128]{1,0:T(1,128)}', space=vmem, size = 0x12000, scoped, tag = 'internal scratch']
  %s0 = inlined_call_operand.hbm [shape: f32[8,16,16], index: 0, kind: input, shape index: {}]
  %s1 = inlined_call_operand.vmem [shape: f32[1,16,8], index: 1, kind: input, shape index: {}]
  %s2 = inlined_call_operand.vmem [shape: f32[1,16,8], index: 2, kind: input, shape index: {}]
  %s3 = inlined_call_operand.hbm [shape: f32[8,8,8], index: 3, kind: output, shape index: {}]
  %s4 = sld [smem:[#allocation0]]
  $region49: #{tpu_custom_call.1} parent=0
    _
  %s6 = ssub.s32 1, %s4
  %s7 = scalar_select 0, %s6, %s4
  $region1: #{tpu_custom_call.1} parent=0
    #allocation2 [shape = 'u8[65536]{0}', space=vmem, size = 0x10000, scoped, tag = 'input window, operand 0']
    #allocation3 [shape = 's32[2]{0}', space=sflag, size = 0x8, scoped, tag = 'scoped memory for tpu_custom_call.1']
    #allocation4 [shape = 's32[2]{0}', space=sflag, size = 0x8, scoped, tag = 'scoped memory for tpu_custom_call.1']
    #allocation5 [shape = 'u8[32768]{0}', space=vmem, size = 0x8000, scoped, tag = 'output window, operand 0']
    %8 = vsyncpa [#allocation3], 0
    %s9 = scalar_lea.sflag [#allocation3], 1
    %10 = vsyncpa %s9, 0
    %11 = vsyncpa [#allocation4], 0
    %s12 = scalar_lea.sflag [#allocation4], 1
    %13 = vsyncpa %s12, 0
    loop: start=0, step=1, limit=4
    $region2: #{tpu_custom_call.1} parent=1 // loop_pre_header
      _
    $region3: #{tpu_custom_call.1} parent=1 // loop_header
      %s15 = sphi 0, %s19
      %p16 = scmp.ge.s32.totalorder %s15, 4
      %s25 = sphi 0, %s27
      %s28 = sphi 0, %s25
      %s29 = sphi 0, %s28
      %s45 = sphi 0, %s29
      %s49 = sphi 0, %s49
      %s51 = sphi 0, %s49
      %s52 = sphi 0, %s51
      %s66 = sphi 0, %s52
      %s70 = sphi 0, %s70
      %s72 = sphi 0, %s70
      %s73 = sphi 0, %s72
      %s87 = sphi 0, %s73
      %s93 = sphi 0, %s95
      %s96 = sphi 0, %s93
      %s97 = sphi 0, %s96
      %s113 = sphi 0, %s97
    $region4: #{tpu_custom_call.1} parent=1 // loop_header_branch
      %18 = sbr.rel (%p16) target = $region8
    $region5: #{tpu_custom_call.1} parent=1 // loop_body
      %s20 = ssub.s32 %s15, 1
      %s21 = ssub.s32 %s15, 2
      %s22 = sadd.s32 %s15, 1
      %s23 = ssub.s32 %s15, %s22
      %p24 = scmp.eq.s32.totalorder %s23, 0
      %s26 = sadd.s32 %s25, 1
      %s27 = scalar_select %p24, %s25, %s26
      %p30 = pneg %p24
      %p31 = scmp.eq.s32.totalorder %s15, 1
      %p32 = por %p30, %p31
      %p33 = scmp.ne.s32.totalorder %s25, %s28
      %p34 = scmp.eq.s32.totalorder %s15, 0
      %p35 = por %p33, %p34
      %p36 = scmp.ne.s32.totalorder %s25, %s28
      %p37 = scmp.eq.s32.totalorder %s20, 1
      %p38 = por %p36, %p37
      %p39 = scmp.ne.s32.totalorder %s28, %s29
      %p40 = scmp.eq.s32.totalorder %s20, 0
      %p41 = por %p39, %p40
      %p42 = scmp.ne.s32.totalorder %s28, %s29
      %p43 = scmp.eq.s32.totalorder %s21, 1
      %p44 = por %p42, %p43
      %p46 = scmp.ne.s32.totalorder %s29, %s45
      %p47 = scmp.eq.s32.totalorder %s21, 0
      %p48 = por %p46, %p47
      %s50 = sadd.s32 %s49, 1
      %p53 = scmp.eq.s32.totalorder %s15, 1
      %p54 = scmp.ne.s32.totalorder %s49, %s51
      %p55 = scmp.eq.s32.totalorder %s15, 0
      %p56 = por %p54, %p55
      %p57 = scmp.ne.s32.totalorder %s49, %s51
      %p58 = scmp.eq.s32.totalorder %s20, 1
      %p59 = por %p57, %p58
      %p60 = scmp.ne.s32.totalorder %s51, %s52
      %p61 = scmp.eq.s32.totalorder %s20, 0
      %p62 = por %p60, %p61
      %p63 = scmp.ne.s32.totalorder %s51, %s52
      %p64 = scmp.eq.s32.totalorder %s21, 1
      %p65 = por %p63, %p64
      %p67 = scmp.ne.s32.totalorder %s52, %s66
      %p68 = scmp.eq.s32.totalorder %s21, 0
      %p69 = por %p67, %p68
      %s71 = sadd.s32 %s70, 1
      %p74 = scmp.eq.s32.totalorder %s15, 1
      %p75 = scmp.ne.s32.totalorder %s70, %s72
      %p76 = scmp.eq.s32.totalorder %s15, 0
      %p77 = por %p75, %p76
      %p78 = scmp.ne.s32.totalorder %s70, %s72
      %p79 = scmp.eq.s32.totalorder %s20, 1
      %p80 = por %p78, %p79
      %p81 = scmp.ne.s32.totalorder %s72, %s73
      %p82 = scmp.eq.s32.totalorder %s20, 0
      %p83 = por %p81, %p82
      %p84 = scmp.ne.s32.totalorder %s72, %s73
      %p85 = scmp.eq.s32.totalorder %s21, 1
      %p86 = por %p84, %p85
      %p88 = scmp.ne.s32.totalorder %s73, %s87
      %p89 = scmp.eq.s32.totalorder %s21, 0
      %p90 = por %p88, %p89
      %s91 = ssub.s32 %s15, %s22
      %p92 = scmp.eq.s32.totalorder %s91, 0
      %s94 = sadd.s32 %s93, 1
      %s95 = scalar_select %p92, %s93, %s94
      %p98 = pneg %p92
      %p99 = scmp.eq.s32.totalorder %s15, 1
      %p100 = por %p98, %p99
      %p101 = scmp.ne.s32.totalorder %s93, %s96
      %p102 = scmp.eq.s32.totalorder %s15, 0
      %p103 = por %p101, %p102
      %p104 = scmp.ne.s32.totalorder %s93, %s96
      %p105 = scmp.eq.s32.totalorder %s20, 1
      %p106 = por %p104, %p105
      %p107 = scmp.ne.s32.totalorder %s96, %s97
      %p108 = scmp.eq.s32.totalorder %s20, 0
      %p109 = por %p107, %p108
      %p110 = scmp.ne.s32.totalorder %s96, %s97
      %p111 = scmp.eq.s32.totalorder %s21, 1
      %p112 = por %p110, %p111
      %p114 = scmp.ne.s32.totalorder %s97, %s113
      %p115 = scmp.eq.s32.totalorder %s21, 0
      %p116 = por %p114, %p115
      %p117 = scmp.le.s32.totalorder 1, %s15
      %p118 = scmp.lt.s32.totalorder %s15, 3
      %p119 = pnand %p117, %p118
      %p120 = pneg %p119
      // Predicated region
      $region9: #{tpu_custom_call.1} parent=5 // pred_check
        _
      $region10: #{tpu_custom_call.1} parent=5 // pred_check_branch
        %122 = sbr.rel (%p119) target = $region12
      $region11: #{tpu_custom_call.1} parent=5 // pred_region
        %s123 = ssub.s32 %s15, 1
        // Predicated region
        $region13: #{tpu_custom_call.1} parent=11 // pred_check
          %p124 = pneg %p62
        $region14: #{tpu_custom_call.1} parent=11 // pred_check_branch
          %126 = sbr.rel (%p124) target = $region16
        $region15: #{tpu_custom_call.1} parent=11 // pred_region
          _
        $region16: #{tpu_custom_call.1} parent=11 // pred_fallthru
          _
        // Predicated region
        $region17: #{tpu_custom_call.1} parent=11 // pred_check
          %p127 = pneg %p83
        $region18: #{tpu_custom_call.1} parent=11 // pred_check_branch
          %129 = sbr.rel (%p127) target = $region20
        $region19: #{tpu_custom_call.1} parent=11 // pred_region
          _
        $region20: #{tpu_custom_call.1} parent=11 // pred_fallthru
          _
      $region12: #{tpu_custom_call.1} parent=5 // pred_fallthru
        _
      %p130 = scmp.lt.s32.totalorder %s15, 2
      // Predicated region
      $region21: #{tpu_custom_call.1} parent=5 // pred_check
        %p131 = pneg %p130
      $region22: #{tpu_custom_call.1} parent=5 // pred_check_branch
        %133 = sbr.rel (%p131) target = $region24
      $region23: #{tpu_custom_call.1} parent=5 // pred_region
        // Predicated region
        $region25: #{tpu_custom_call.1} parent=23 // pred_check
          %p134 = pneg %p35
        $region26: #{tpu_custom_call.1} parent=23 // pred_check_branch
          %136 = sbr.rel (%p134) target = $region28
        $region27: #{tpu_custom_call.1} parent=23 // pred_region
          %s137 = sand.u32 %s25, 1
          %s138 = scalar_lea.sflag [#allocation3], %s137
          %s139 = sand.u32 %s25, 1
          %s140 = smul.addr %s139, 64
          %s141 = scalar_lea.vmem [#allocation2], %s140
          %s142 = smul.u32 4, %s15
          %s144 = ssub.s32 1024, 1024
          %145 = vsyncadd %s138, %s144
          %s146 = smul.addr %s142, 2
          %s147 = smul.addr %s146, 128
          %s148 = scalar_lea.hbm %s0, %s147
          %s149 = sshll.u32 %s141, 4
          %s150 = int_to_ptr.vmem [resolvable:$true] %s149
          %155 = dma.hbm_to_vmem [thread:$0]  %s148, 1024, %s150, %s138, 128, 128, 8
        $region28: #{tpu_custom_call.1} parent=23 // pred_fallthru
          _
      $region24: #{tpu_custom_call.1} parent=5 // pred_fallthru
        _
      %p156 = scmp.le.s32.totalorder 1, %s15
      %p157 = scmp.lt.s32.totalorder %s15, 3
      %p158 = pnand %p156, %p157
      %p159 = pneg %p158
      // Predicated region
      $region29: #{tpu_custom_call.1} parent=5 // pred_check
        _
      $region30: #{tpu_custom_call.1} parent=5 // pred_check_branch
        %161 = sbr.rel (%p158) target = $region32
      $region31: #{tpu_custom_call.1} parent=5 // pred_region
        %s162 = ssub.s32 %s15, 1
        %s163 = sand.u32 %s28, 1
        %s164 = scalar_lea.sflag [#allocation3], %s163
        %s165 = sand.u32 %s28, 1
        %s166 = smul.addr %s165, 64
        %s167 = scalar_lea.vmem [#allocation2], %s166
        // Predicated region
        $region33: #{tpu_custom_call.1} parent=31 // pred_check
          %p168 = pneg %p41
        $region34: #{tpu_custom_call.1} parent=31 // pred_check_branch
          %170 = sbr.rel (%p168) target = $region36
        $region35: #{tpu_custom_call.1} parent=31 // pred_region
          %171 = dma.done %s164, 1024
        $region36: #{tpu_custom_call.1} parent=31 // pred_fallthru
          _
        %s172 = sand.u32 %s28, 1
        %s173 = scalar_lea.sflag [#allocation3], %s172
        %s174 = sand.u32 %s28, 1
        %s175 = smul.addr %s174, 64
        %s176 = scalar_lea.vmem [#allocation2], %s175
        %p177 = pneg %p41
        %p178 = pneg %p38
        %p179 = pneg %p62
        %p180 = pneg %p59
        %p181 = pneg %p83
        %p182 = pneg %p80
        %p183 = pneg %p109
        %p184 = pneg %p106
        %s185 = sand.u32 %s96, 1
        %s186 = scalar_lea.sflag [#allocation4], %s185
        %s187 = sand.u32 %s96, 1
        %s188 = smul.addr %s187, 32
        %s189 = scalar_lea.vmem [#allocation5], %s188
        %s190 = smul.u32 4, %s20
        %s191 = smul.u32 4, %s20
        %v192 = vld [vmem:[%s167] sm:$0xff]
        %v193 = vld [vmem:[%s167 + $0x8] sm:$0xff]
        %v194 = vld [vmem:[%s167 + $0x10] sm:$0xff]
        %v195 = vld [vmem:[%s167 + $0x18] sm:$0xff]
        %v196 = vld [vmem:[%s167 + $0x20] sm:$0xff]
        %v197 = vld [vmem:[%s167 + $0x28] sm:$0xff]
        %v198 = vld [vmem:[%s167 + $0x30] sm:$0xff]
        %v199 = vld [vmem:[%s167 + $0x38] sm:$0xff]
        %v200 = vld [vmem:[%s1] sm:$0xff]
        %v201 = vld [vmem:[%s1 + $0x8] sm:$0xff]
        %vm202 = vcmask 130048
        %v204 = vsel %vm202, %v192, 0
        %v207 = vsel %vm202, %v193, 0
        %v210 = vsel %vm202, %v194, 0
        %v213 = vsel %vm202, %v195, 0
        %v216 = vsel %vm202, %v196, 0
        %v219 = vsel %vm202, %v197, 0
        %v222 = vsel %vm202, %v198, 0
        %v225 = vsel %vm202, %v199, 0
        %227 = vmatprep.subr.mxu0 0.0
        %228 = vmatpush1.msra.mxu0 0.0
        %229 = vmatprep.subr.mxu0 0.0
        %230 = vmatpush1.msra.mxu0 0.0
        %231 = vmatprep.subr.mxu0 0.0
        %232 = vmatpush1.msra.mxu0 0.0
        %233 = vmatprep.subr.mxu0 0.0
        %234 = vmatpush1.msra.mxu0 0.0
        %235 = vmatprep.subr.mxu0 0.0
        %236 = vmatpush1.msra.mxu0 0.0
        %237 = vmatprep.subr.mxu0 0.0
        %238 = vmatpush1.msra.mxu0 0.0
        %239 = vmatprep.subr.mxu0 0.0
        %240 = vmatpush1.msra.mxu0 0.0
        %241 = vmatprep.subr.mxu0 0.0
        %242 = vmatpush1.msra.mxu0 0.0
        %243 = vmatprep.subr.mxu0 0.0
        %244 = vmatpush1.msra.mxu0 0.0
        %245 = vmatprep.subr.mxu0 0.0
        %246 = vmatpush1.msra.mxu0 0.0
        %247 = vmatprep.subr.mxu0 0.0
        %248 = vmatpush1.msra.mxu0 0.0
        %249 = vmatprep.subr.mxu0 0.0
        %250 = vmatpush1.msra.mxu0 0.0
        %251 = vmatprep.subr.mxu0 0.0
        %252 = vmatpush1.msra.mxu0 0.0
        %253 = vmatprep.subr.mxu0 0.0
        %254 = vmatpush1.msra.mxu0 0.0
        %255 = vmatprep.subr.mxu0 0.0
        %256 = vmatpush1.msra.mxu0 %v201
        %257 = vmatprep.subr.mxu0 0.0
        %258 = vmatpush1.msra.mxu0 %v200
        %259 = vmatprep.subr.mxu0 0.0
        %260 = vmatpush2.msra.mxu0 0.0
        %261 = vmatprep.subr.mxu0 0.0
        %262 = vmatpush2.msra.mxu0 0.0
        %263 = vmatprep.subr.mxu0 0.0
        %264 = vmatpush2.msra.mxu0 0.0
        %265 = vmatprep.subr.mxu0 0.0
        %266 = vmatpush2.msra.mxu0 0.0
        %267 = vmatprep.subr.mxu0 0.0
        %268 = vmatpush2.msra.mxu0 0.0
        %269 = vmatprep.subr.mxu0 0.0
        %270 = vmatpush2.msra.mxu0 0.0
        %271 = vmatprep.subr.mxu0 0.0
        %272 = vmatpush2.msra.mxu0 0.0
        %273 = vmatprep.subr.mxu0 0.0
        %274 = vmatpush2.msra.mxu0 0.0
        %275 = vmatprep.subr.mxu0 0.0
        %276 = vmatpush2.msra.mxu0 0.0
        %277 = vmatprep.subr.mxu0 0.0
        %278 = vmatpush2.msra.mxu0 0.0
        %279 = vmatprep.subr.mxu0 0.0
        %280 = vmatpush2.msra.mxu0 0.0
        %281 = vmatprep.subr.mxu0 0.0
        %282 = vmatpush2.msra.mxu0 0.0
        %283 = vmatprep.subr.mxu0 0.0
        %284 = vmatpush2.msra.mxu0 0.0
        %285 = vmatprep.subr.mxu0 0.0
        %286 = vmatpush2.msra.mxu0 0.0
        %287 = vmatprep.subr.mxu0 0.0
        %288 = vmatpush2.msra.mxu0 0.0
        %289 = vmatprep.subr.mxu0 0.0
        %290 = vmatpush2.msra.mxu0 0.0
        %291 = vmatprep.mubr.f32.mxu0 0.0
        %292 = vmatmul.mubr.f32.gmra.mxu0 %v204
        %v293 = vpop.f32.mrf.mxu0
        %v294 = vadd.f32 0.0, %v293
        %v295 = vpop.f32.mrf.mxu0
        %296 = vmatprep.mubr.f32.mxu0 0.0
        %297 = vmatmul.mubr.f32.gmra.mxu0 %v207
        %v298 = vpop.f32.mrf.mxu0
        %v299 = vadd.f32 0.0, %v298
        %v300 = vpop.f32.mrf.mxu0
        %301 = vmatprep.mubr.f32.mxu0 0.0
        %302 = vmatmul.mubr.f32.gmra.mxu0 %v210
        %v303 = vpop.f32.mrf.mxu0
        %v304 = vadd.f32 0.0, %v303
        %v305 = vpop.f32.mrf.mxu0
        %306 = vmatprep.mubr.f32.mxu0 0.0
        %307 = vmatmul.mubr.f32.gmra.mxu0 %v213
        %v308 = vpop.f32.mrf.mxu0
        %v309 = vadd.f32 0.0, %v308
        %v310 = vpop.f32.mrf.mxu0
        %311 = vmatprep.mubr.f32.mxu0 0.0
        %312 = vmatmul.mubr.f32.gmra.mxu0 %v216
        %v313 = vpop.f32.mrf.mxu0
        %v314 = vadd.f32 0.0, %v313
        %v315 = vpop.f32.mrf.mxu0
        %316 = vmatprep.mubr.f32.mxu0 0.0
        %317 = vmatmul.mubr.f32.gmra.mxu0 %v219
        %v318 = vpop.f32.mrf.mxu0
        %v319 = vadd.f32 0.0, %v318
        %v320 = vpop.f32.mrf.mxu0
        %321 = vmatprep.mubr.f32.mxu0 0.0
        %322 = vmatmul.mubr.f32.gmra.mxu0 %v222
        %v323 = vpop.f32.mrf.mxu0
        %v324 = vadd.f32 0.0, %v323
        %v325 = vpop.f32.mrf.mxu0
        %326 = vmatprep.mubr.f32.mxu0 0.0
        %327 = vmatmul.mubr.f32.gmra.mxu0 %v225
        %v328 = vpop.f32.mrf.mxu0
        %v329 = vadd.f32 0.0, %v328
        %v330 = vpop.f32.mrf.mxu0
        %331 = vdwg.mxu0
        %332 = vxpose.xlu0.b32.start [1/16] %v294, 128
        %333 = vxpose.xlu0.b32.cont [2/16] %v299, 128
        %334 = vxpose.xlu0.b32.cont [3/16] 0.0, 128
        %335 = vxpose.xlu0.b32.cont [4/16] 0.0, 128
        %336 = vxpose.xlu0.b32.cont [5/16] 0.0, 128
        %337 = vxpose.xlu0.b32.cont [6/16] 0.0, 128
        %338 = vxpose.xlu0.b32.cont [7/16] 0.0, 128
        %339 = vxpose.xlu0.b32.cont [8/16] 0.0, 128
        %340 = vxpose.xlu0.b32.cont [9/16] 0.0, 128
        %341 = vxpose.xlu0.b32.cont [10/16] 0.0, 128
        %342 = vxpose.xlu0.b32.cont [11/16] 0.0, 128
        %343 = vxpose.xlu0.b32.cont [12/16] 0.0, 128
        %344 = vxpose.xlu0.b32.cont [13/16] 0.0, 128
        %345 = vxpose.xlu0.b32.cont [14/16] 0.0, 128
        %346 = vxpose.xlu0.b32.cont [15/16] 0.0, 128
        %347 = vxpose.xlu0.b32.end [16/16] 0.0, 128
        %v348 = vpop.trf.xlu0
        %v349 = vpop.trf.xlu0
        %v350 = vpop.trf.xlu0
        %v351 = vpop.trf.xlu0
        %v352 = vpop.trf.xlu0
        %v353 = vpop.trf.xlu0
        %v354 = vpop.trf.xlu0
        %v355 = vpop.trf.xlu0
        %v356 = vpop.trf.xlu0
        %v357 = vpop.trf.xlu0
        %v358 = vpop.trf.xlu0
        %v359 = vpop.trf.xlu0
        %v360 = vpop.trf.xlu0
        %v361 = vpop.trf.xlu0
        %v362 = vpop.trf.xlu0
        %v363 = vpop.trf.xlu0
        %364 = vxpose.xlu0.b32.start [1/16] %v304, 128
        %365 = vxpose.xlu0.b32.cont [2/16] %v309, 128
        %366 = vxpose.xlu0.b32.cont [3/16] 0.0, 128
        %367 = vxpose.xlu0.b32.cont [4/16] 0.0, 128
        %368 = vxpose.xlu0.b32.cont [5/16] 0.0, 128
        %369 = vxpose.xlu0.b32.cont [6/16] 0.0, 128
        %370 = vxpose.xlu0.b32.cont [7/16] 0.0, 128
        %371 = vxpose.xlu0.b32.cont [8/16] 0.0, 128
        %372 = vxpose.xlu0.b32.cont [9/16] 0.0, 128
        %373 = vxpose.xlu0.b32.cont [10/16] 0.0, 128
        %374 = vxpose.xlu0.b32.cont [11/16] 0.0, 128
        %375 = vxpose.xlu0.b32.cont [12/16] 0.0, 128
        %376 = vxpose.xlu0.b32.cont [13/16] 0.0, 128
        %377 = vxpose.xlu0.b32.cont [14/16] 0.0, 128
        %378 = vxpose.xlu0.b32.cont [15/16] 0.0, 128
        %379 = vxpose.xlu0.b32.end [16/16] 0.0, 128
        %v380 = vpop.trf.xlu0
        %v381 = vpop.trf.xlu0
        %v382 = vpop.trf.xlu0
        %v383 = vpop.trf.xlu0
        %v384 = vpop.trf.xlu0
        %v385 = vpop.trf.xlu0
        %v386 = vpop.trf.xlu0
        %v387 = vpop.trf.xlu0
        %v388 = vpop.trf.xlu0
        %v389 = vpop.trf.xlu0
        %v390 = vpop.trf.xlu0
        %v391 = vpop.trf.xlu0
        %v392 = vpop.trf.xlu0
        %v393 = vpop.trf.xlu0
        %v394 = vpop.trf.xlu0
        %v395 = vpop.trf.xlu0
        %396 = vxpose.xlu0.b32.start [1/16] %v314, 128
        %397 = vxpose.xlu0.b32.cont [2/16] %v319, 128
        %398 = vxpose.xlu0.b32.cont [3/16] 0.0, 128
        %399 = vxpose.xlu0.b32.cont [4/16] 0.0, 128
        %400 = vxpose.xlu0.b32.cont [5/16] 0.0, 128
        %401 = vxpose.xlu0.b32.cont [6/16] 0.0, 128
        %402 = vxpose.xlu0.b32.cont [7/16] 0.0, 128
        %403 = vxpose.xlu0.b32.cont [8/16] 0.0, 128
        %404 = vxpose.xlu0.b32.cont [9/16] 0.0, 128
        %405 = vxpose.xlu0.b32.cont [10/16] 0.0, 128
        %406 = vxpose.xlu0.b32.cont [11/16] 0.0, 128
        %407 = vxpose.xlu0.b32.cont [12/16] 0.0, 128
        %408 = vxpose.xlu0.b32.cont [13/16] 0.0, 128
        %409 = vxpose.xlu0.b32.cont [14/16] 0.0, 128
        %410 = vxpose.xlu0.b32.cont [15/16] 0.0, 128
        %411 = vxpose.xlu0.b32.end [16/16] 0.0, 128
        %v412 = vpop.trf.xlu0
        %v413 = vpop.trf.xlu0
        %v414 = vpop.trf.xlu0
        %v415 = vpop.trf.xlu0
        %v416 = vpop.trf.xlu0
        %v417 = vpop.trf.xlu0
        %v418 = vpop.trf.xlu0
        %v419 = vpop.trf.xlu0
        %v420 = vpop.trf.xlu0
        %v421 = vpop.trf.xlu0
        %v422 = vpop.trf.xlu0
        %v423 = vpop.trf.xlu0
        %v424 = vpop.trf.xlu0
        %v425 = vpop.trf.xlu0
        %v426 = vpop.trf.xlu0
        %v427 = vpop.trf.xlu0
        %428 = vxpose.xlu0.b32.start [1/16] %v324, 128
        %429 = vxpose.xlu0.b32.cont [2/16] %v329, 128
        %430 = vxpose.xlu0.b32.cont [3/16] 0.0, 128
        %431 = vxpose.xlu0.b32.cont [4/16] 0.0, 128
        %432 = vxpose.xlu0.b32.cont [5/16] 0.0, 128
        %433 = vxpose.xlu0.b32.cont [6/16] 0.0, 128
        %434 = vxpose.xlu0.b32.cont [7/16] 0.0, 128
        %435 = vxpose.xlu0.b32.cont [8/16] 0.0, 128
        %436 = vxpose.xlu0.b32.cont [9/16] 0.0, 128
        %437 = vxpose.xlu0.b32.cont [10/16] 0.0, 128
        %438 = vxpose.xlu0.b32.cont [11/16] 0.0, 128
        %439 = vxpose.xlu0.b32.cont [12/16] 0.0, 128
        %440 = vxpose.xlu0.b32.cont [13/16] 0.0, 128
        %441 = vxpose.xlu0.b32.cont [14/16] 0.0, 128
        %442 = vxpose.xlu0.b32.cont [15/16] 0.0, 128
        %443 = vxpose.xlu0.b32.end [16/16] 0.0, 128
        %v444 = vpop.trf.xlu0
        %v445 = vpop.trf.xlu0
        %v446 = vpop.trf.xlu0
        %v447 = vpop.trf.xlu0
        %v448 = vpop.trf.xlu0
        %v449 = vpop.trf.xlu0
        %v450 = vpop.trf.xlu0
        %v451 = vpop.trf.xlu0
        %v452 = vpop.trf.xlu0
        %v453 = vpop.trf.xlu0
        %v454 = vpop.trf.xlu0
        %v455 = vpop.trf.xlu0
        %v456 = vpop.trf.xlu0
        %v457 = vpop.trf.xlu0
        %v458 = vpop.trf.xlu0
        %v459 = vpop.trf.xlu0
        %v460 = vld [vmem:[%s2] sm:$0xff]
        %v461 = vld [vmem:[%s2 + $0x8] sm:$0xff]
        %v463 = vsel %vm202, %v348, 0
        %v466 = vsel %vm202, %v380, 0
        %v469 = vsel %vm202, %v412, 0
        %v472 = vsel %vm202, %v444, 0
        %474 = vmatprep.subr.mxu0 0.0
        %475 = vmatpush1.msra.mxu0 0.0
        %476 = vmatprep.subr.mxu0 0.0
        %477 = vmatpush1.msra.mxu0 0.0
        %478 = vmatprep.subr.mxu0 0.0
        %479 = vmatpush1.msra.mxu0 0.0
        %480 = vmatprep.subr.mxu0 0.0
        %481 = vmatpush1.msra.mxu0 0.0
        %482 = vmatprep.subr.mxu0 0.0
        %483 = vmatpush1.msra.mxu0 0.0
        %484 = vmatprep.subr.mxu0 0.0
        %485 = vmatpush1.msra.mxu0 0.0
        %486 = vmatprep.subr.mxu0 0.0
        %487 = vmatpush1.msra.mxu0 0.0
        %488 = vmatprep.subr.mxu0 0.0
        %489 = vmatpush1.msra.mxu0 0.0
        %490 = vmatprep.subr.mxu0 0.0
        %491 = vmatpush1.msra.mxu0 0.0
        %492 = vmatprep.subr.mxu0 0.0
        %493 = vmatpush1.msra.mxu0 0.0
        %494 = vmatprep.subr.mxu0 0.0
        %495 = vmatpush1.msra.mxu0 0.0
        %496 = vmatprep.subr.mxu0 0.0
        %497 = vmatpush1.msra.mxu0 0.0
        %498 = vmatprep.subr.mxu0 0.0
        %499 = vmatpush1.msra.mxu0 0.0
        %500 = vmatprep.subr.mxu0 0.0
        %501 = vmatpush1.msra.mxu0 0.0
        %502 = vmatprep.subr.mxu0 0.0
        %503 = vmatpush1.msra.mxu0 %v461
        %504 = vmatprep.subr.mxu0 0.0
        %505 = vmatpush1.msra.mxu0 %v460
        %506 = vmatprep.subr.mxu0 0.0
        %507 = vmatpush2.msra.mxu0 0.0
        %508 = vmatprep.subr.mxu0 0.0
        %509 = vmatpush2.msra.mxu0 0.0
        %510 = vmatprep.subr.mxu0 0.0
        %511 = vmatpush2.msra.mxu0 0.0
        %512 = vmatprep.subr.mxu0 0.0
        %513 = vmatpush2.msra.mxu0 0.0
        %514 = vmatprep.subr.mxu0 0.0
        %515 = vmatpush2.msra.mxu0 0.0
        %516 = vmatprep.subr.mxu0 0.0
        %517 = vmatpush2.msra.mxu0 0.0
        %518 = vmatprep.subr.mxu0 0.0
        %519 = vmatpush2.msra.mxu0 0.0
        %520 = vmatprep.subr.mxu0 0.0
        %521 = vmatpush2.msra.mxu0 0.0
        %522 = vmatprep.subr.mxu0 0.0
        %523 = vmatpush2.msra.mxu0 0.0
        %524 = vmatprep.subr.mxu0 0.0
        %525 = vmatpush2.msra.mxu0 0.0
        %526 = vmatprep.subr.mxu0 0.0
        %527 = vmatpush2.msra.mxu0 0.0
        %528 = vmatprep.subr.mxu0 0.0
        %529 = vmatpush2.msra.mxu0 0.0
        %530 = vmatprep.subr.mxu0 0.0
        %531 = vmatpush2.msra.mxu0 0.0
        %532 = vmatprep.subr.mxu0 0.0
        %533 = vmatpush2.msra.mxu0 0.0
        %534 = vmatprep.subr.mxu0 0.0
        %535 = vmatpush2.msra.mxu0 0.0
        %536 = vmatprep.subr.mxu0 0.0
        %537 = vmatpush2.msra.mxu0 0.0
        %538 = vmatprep.mubr.f32.mxu0 0.0
        %539 = vmatmul.mubr.f32.gmra.mxu0 %v463
        %v540 = vpop.f32.mrf.mxu0
        %v541 = vadd.f32 0.0, %v540
        %v542 = vpop.f32.mrf.mxu0
        %543 = vmatprep.mubr.f32.mxu0 0.0
        %544 = vmatmul.mubr.f32.gmra.mxu0 %v466
        %v545 = vpop.f32.mrf.mxu0
        %v546 = vadd.f32 0.0, %v545
        %v547 = vpop.f32.mrf.mxu0
        %548 = vmatprep.mubr.f32.mxu0 0.0
        %549 = vmatmul.mubr.f32.gmra.mxu0 %v469
        %v550 = vpop.f32.mrf.mxu0
        %v551 = vadd.f32 0.0, %v550
        %v552 = vpop.f32.mrf.mxu0
        %553 = vmatprep.mubr.f32.mxu0 0.0
        %554 = vmatmul.mubr.f32.gmra.mxu0 %v472
        %v555 = vpop.f32.mrf.mxu0
        %v556 = vadd.f32 0.0, %v555
        %v557 = vpop.f32.mrf.mxu0
        %558 = vdwg.mxu0
        %559 = vxpose.xlu0.b32.start [1/16] %v541, 128
        %560 = vxpose.xlu0.b32.cont [2/16] 0.0, 128
        %561 = vxpose.xlu0.b32.cont [3/16] 0.0, 128
        %562 = vxpose.xlu0.b32.cont [4/16] 0.0, 128
        %563 = vxpose.xlu0.b32.cont [5/16] 0.0, 128
        %564 = vxpose.xlu0.b32.cont [6/16] 0.0, 128
        %565 = vxpose.xlu0.b32.cont [7/16] 0.0, 128
        %566 = vxpose.xlu0.b32.cont [8/16] 0.0, 128
        %567 = vxpose.xlu0.b32.cont [9/16] 0.0, 128
        %568 = vxpose.xlu0.b32.cont [10/16] 0.0, 128
        %569 = vxpose.xlu0.b32.cont [11/16] 0.0, 128
        %570 = vxpose.xlu0.b32.cont [12/16] 0.0, 128
        %571 = vxpose.xlu0.b32.cont [13/16] 0.0, 128
        %572 = vxpose.xlu0.b32.cont [14/16] 0.0, 128
        %573 = vxpose.xlu0.b32.cont [15/16] 0.0, 128
        %574 = vxpose.xlu0.b32.end [16/16] 0.0, 128
        %v575 = vpop.trf.xlu0
        %v576 = vpop.trf.xlu0
        %v577 = vpop.trf.xlu0
        %v578 = vpop.trf.xlu0
        %v579 = vpop.trf.xlu0
        %v580 = vpop.trf.xlu0
        %v581 = vpop.trf.xlu0
        %v582 = vpop.trf.xlu0
        %v583 = vpop.trf.xlu0
        %v584 = vpop.trf.xlu0
        %v585 = vpop.trf.xlu0
        %v586 = vpop.trf.xlu0
        %v587 = vpop.trf.xlu0
        %v588 = vpop.trf.xlu0
        %v589 = vpop.trf.xlu0
        %v590 = vpop.trf.xlu0
        %591 = vxpose.xlu0.b32.start [1/16] %v546, 128
        %592 = vxpose.xlu0.b32.cont [2/16] 0.0, 128
        %593 = vxpose.xlu0.b32.cont [3/16] 0.0, 128
        %594 = vxpose.xlu0.b32.cont [4/16] 0.0, 128
        %595 = vxpose.xlu0.b32.cont [5/16] 0.0, 128
        %596 = vxpose.xlu0.b32.cont [6/16] 0.0, 128
        %597 = vxpose.xlu0.b32.cont [7/16] 0.0, 128
        %598 = vxpose.xlu0.b32.cont [8/16] 0.0, 128
        %599 = vxpose.xlu0.b32.cont [9/16] 0.0, 128
        %600 = vxpose.xlu0.b32.cont [10/16] 0.0, 128
        %601 = vxpose.xlu0.b32.cont [11/16] 0.0, 128
        %602 = vxpose.xlu0.b32.cont [12/16] 0.0, 128
        %603 = vxpose.xlu0.b32.cont [13/16] 0.0, 128
        %604 = vxpose.xlu0.b32.cont [14/16] 0.0, 128
        %605 = vxpose.xlu0.b32.cont [15/16] 0.0, 128
        %606 = vxpose.xlu0.b32.end [16/16] 0.0, 128
        %v607 = vpop.trf.xlu0
        %v608 = vpop.trf.xlu0
        %v609 = vpop.trf.xlu0
        %v610 = vpop.trf.xlu0
        %v611 = vpop.trf.xlu0
        %v612 = vpop.trf.xlu0
        %v613 = vpop.trf.xlu0
        %v614 = vpop.trf.xlu0
        %v615 = vpop.trf.xlu0
        %v616 = vpop.trf.xlu0
        %v617 = vpop.trf.xlu0
        %v618 = vpop.trf.xlu0
        %v619 = vpop.trf.xlu0
        %v620 = vpop.trf.xlu0
        %v621 = vpop.trf.xlu0
        %v622 = vpop.trf.xlu0
        %623 = vxpose.xlu0.b32.start [1/16] %v551, 128
        %624 = vxpose.xlu0.b32.cont [2/16] 0.0, 128
        %625 = vxpose.xlu0.b32.cont [3/16] 0.0, 128
        %626 = vxpose.xlu0.b32.cont [4/16] 0.0, 128
        %627 = vxpose.xlu0.b32.cont [5/16] 0.0, 128
        %628 = vxpose.xlu0.b32.cont [6/16] 0.0, 128
        %629 = vxpose.xlu0.b32.cont [7/16] 0.0, 128
        %630 = vxpose.xlu0.b32.cont [8/16] 0.0, 128
        %631 = vxpose.xlu0.b32.cont [9/16] 0.0, 128
        %632 = vxpose.xlu0.b32.cont [10/16] 0.0, 128
        %633 = vxpose.xlu0.b32.cont [11/16] 0.0, 128
        %634 = vxpose.xlu0.b32.cont [12/16] 0.0, 128
        %635 = vxpose.xlu0.b32.cont [13/16] 0.0, 128
        %636 = vxpose.xlu0.b32.cont [14/16] 0.0, 128
        %637 = vxpose.xlu0.b32.cont [15/16] 0.0, 128
        %638 = vxpose.xlu0.b32.end [16/16] 0.0, 128
        %v639 = vpop.trf.xlu0
        %v640 = vpop.trf.xlu0
        %v641 = vpop.trf.xlu0
        %v642 = vpop.trf.xlu0
        %v643 = vpop.trf.xlu0
        %v644 = vpop.trf.xlu0
        %v645 = vpop.trf.xlu0
        %v646 = vpop.trf.xlu0
        %v647 = vpop.trf.xlu0
        %v648 = vpop.trf.xlu0
        %v649 = vpop.trf.xlu0
        %v650 = vpop.trf.xlu0
        %v651 = vpop.trf.xlu0
        %v652 = vpop.trf.xlu0
        %v653 = vpop.trf.xlu0
        %v654 = vpop.trf.xlu0
        %655 = vxpose.xlu0.b32.start [1/16] %v556, 128
        %656 = vxpose.xlu0.b32.cont [2/16] 0.0, 128
        %657 = vxpose.xlu0.b32.cont [3/16] 0.0, 128
        %658 = vxpose.xlu0.b32.cont [4/16] 0.0, 128
        %659 = vxpose.xlu0.b32.cont [5/16] 0.0, 128
        %660 = vxpose.xlu0.b32.cont [6/16] 0.0, 128
        %661 = vxpose.xlu0.b32.cont [7/16] 0.0, 128
        %662 = vxpose.xlu0.b32.cont [8/16] 0.0, 128
        %663 = vxpose.xlu0.b32.cont [9/16] 0.0, 128
        %664 = vxpose.xlu0.b32.cont [10/16] 0.0, 128
        %665 = vxpose.xlu0.b32.cont [11/16] 0.0, 128
        %666 = vxpose.xlu0.b32.cont [12/16] 0.0, 128
        %667 = vxpose.xlu0.b32.cont [13/16] 0.0, 128
        %668 = vxpose.xlu0.b32.cont [14/16] 0.0, 128
        %669 = vxpose.xlu0.b32.cont [15/16] 0.0, 128
        %670 = vxpose.xlu0.b32.end [16/16] 0.0, 128
        %v671 = vpop.trf.xlu0
        %v672 = vpop.trf.xlu0
        %v673 = vpop.trf.xlu0
        %v674 = vpop.trf.xlu0
        %v675 = vpop.trf.xlu0
        %v676 = vpop.trf.xlu0
        %v677 = vpop.trf.xlu0
        %v678 = vpop.trf.xlu0
        %v679 = vpop.trf.xlu0
        %v680 = vpop.trf.xlu0
        %v681 = vpop.trf.xlu0
        %v682 = vpop.trf.xlu0
        %v683 = vpop.trf.xlu0
        %v684 = vpop.trf.xlu0
        %v685 = vpop.trf.xlu0
        %v686 = vpop.trf.xlu0
        %vm687 = vcmask 64512
        %688 = vst.msk [vmem:[%s189] sm:$0xff] %vm687, %v575
        %689 = vst.msk [vmem:[%s189 + $0x8] sm:$0xff] %vm687, %v607
        %690 = vst.msk [vmem:[%s189 + $0x10] sm:$0xff] %vm687, %v639
        %691 = vst.msk [vmem:[%s189 + $0x18] sm:$0xff] %vm687, %v671
        %s692 = sand.u32 %s96, 1
        %s693 = scalar_lea.sflag [#allocation4], %s692
        %s694 = sand.u32 %s96, 1
        %s695 = smul.addr %s694, 32
        %s696 = scalar_lea.vmem [#allocation5], %s695
        // Predicated region
        $region37: #{tpu_custom_call.1} parent=31 // pred_check
          %p697 = pneg %p106
        $region38: #{tpu_custom_call.1} parent=31 // pred_check_branch
          %699 = sbr.rel (%p697) target = $region40
        $region39: #{tpu_custom_call.1} parent=31 // pred_region
          %s700 = smul.u32 4, %s20
          %s702 = ssub.s32 512, 512
          %703 = vsyncadd %s693, %s702
          %s704 = smul.addr %s700, 128
          %s705 = scalar_lea.hbm %s3, %s704
          %s706 = sshll.u32 %s696, 4
          %s707 = int_to_ptr.vmem [resolvable:$true] %s706
          %712 = dma.vmem_to_hbm [thread:$0]  %s707, 512, %s705, %s693, 128, 128, 8
        $region40: #{tpu_custom_call.1} parent=31 // pred_fallthru
          _
      $region32: #{tpu_custom_call.1} parent=5 // pred_fallthru
        _
      %p713 = scmp.le.s32.totalorder 2, %s15
      // Predicated region
      $region41: #{tpu_custom_call.1} parent=5 // pred_check
        %p714 = pneg %p713
      $region42: #{tpu_custom_call.1} parent=5 // pred_check_branch
        %716 = sbr.rel (%p714) target = $region44
      $region43: #{tpu_custom_call.1} parent=5 // pred_region
        %s717 = ssub.s32 %s15, 2
        // Predicated region
        $region45: #{tpu_custom_call.1} parent=43 // pred_check
          %p718 = pneg %p112
        $region46: #{tpu_custom_call.1} parent=43 // pred_check_branch
          %720 = sbr.rel (%p718) target = $region48
        $region47: #{tpu_custom_call.1} parent=43 // pred_region
          %s721 = sand.u32 %s97, 1
          %s722 = scalar_lea.sflag [#allocation4], %s721
          %s723 = sand.u32 %s97, 1
          %s724 = smul.addr %s723, 32
          %s725 = scalar_lea.vmem [#allocation5], %s724
          %726 = dma.done %s722, 512
        $region48: #{tpu_custom_call.1} parent=43 // pred_fallthru
          _
      $region44: #{tpu_custom_call.1} parent=5 // pred_fallthru
        _
    $region6: #{tpu_custom_call.1} parent=1 // loop_footer
      %s19 = sadd.s32 1, %s15
    $region7: #{tpu_custom_call.1} parent=1 // loop_footer_branch
      %14 = sbr.rel target = $region3
    $region8: #{tpu_custom_call.1} parent=1 // loop_exit
      _
    %727 = vsyncpa [#allocation3], 1
    %s728 = scalar_lea.sflag [#allocation3], 1
    %729 = vsyncpa %s728, 1
    %730 = vsyncpa [#allocation4], 1
    %s731 = scalar_lea.sflag [#allocation4], 1
    %732 = vsyncpa %s731, 1

</llo_original>
